<compile_context>
chip_gen: v6e
topology: v6e:2x2x1
jax: 0.10.0
libtpu: 0.0.40
codegen_flags: <defaults>
</compile_context>

<pallas_src>
import functools
import math

import jax
import jax.numpy as jnp
from jax.experimental import pallas as pl
from jax.experimental.pallas import tpu as pltpu


def _round_up(x: int, m: int) -> int:
    return (x + m - 1) // m * m


def _cdiv(a: int, b: int) -> int:
    return (a + b - 1) // b


def _silu_gate(h, bgv, *, approx_sigmoid, ew_dtype):
    """h: (tm, 2*F) f32 MXU output (pre-bias); bgv: (1, 2*F) f32 fused [b1|bv]."""
    h = h + bgv
    F = h.shape[-1] // 2
    gate = h[:, :F]
    value = h[:, F:]
    if approx_sigmoid:
        # exp on EUP + approx reciprocal on EUP -> frees VALU slots.
        sig = pl.reciprocal(1.0 + jnp.exp(-gate), approx=True)
    else:
        sig = jax.nn.sigmoid(gate)
    if jnp.dtype(ew_dtype) == jnp.dtype(jnp.float32):
        return gate * sig * value
    # bf16 elementwise (v6e/v7x have bf16 VPU); sigmoid itself stays f32.
    return (gate.astype(ew_dtype) * sig.astype(ew_dtype)) * value.astype(ew_dtype)


def _ffn_kernel_resident(x_ref, wgv_ref, bgv_ref, w2_ref, b2_ref, o_ref, *,
                         approx_sigmoid, ew_dtype):
    """Weights fully resident in VMEM; 1-D grid over row tiles."""
    h = jnp.dot(x_ref[...], wgv_ref[...], preferred_element_type=jnp.float32)
    gated = _silu_gate(h, bgv_ref[...],
                       approx_sigmoid=approx_sigmoid, ew_dtype=ew_dtype)
    acc = jnp.dot(gated.astype(w2_ref.dtype), w2_ref[...],
                  preferred_element_type=jnp.float32)
    o_ref[...] = (acc + b2_ref[...]).astype(o_ref.dtype)


def _ffn_kernel_tiled(x_ref, wgv_ref, bgv_ref, w2_ref, b2_ref, o_ref, acc_ref, *,
                      approx_sigmoid, ew_dtype):
    """Tiled d_ff reduction; grid = (Mp//tm, n_ff), reduction axis last."""
    j = pl.program_id(1)
    h = jnp.dot(x_ref[...], wgv_ref[...], preferred_element_type=jnp.float32)
    gated = _silu_gate(h, bgv_ref[...],
                       approx_sigmoid=approx_sigmoid, ew_dtype=ew_dtype)
    partial = jnp.dot(gated.astype(w2_ref.dtype), w2_ref[...],
                      preferred_element_type=jnp.float32)

    @pl.when(j == 0)
    def _first():
        acc_ref[...] = partial            # no zero-init memset on step 0

    @pl.when(j > 0)
    def _accum():
        acc_ref[...] += partial

    @pl.when(j == pl.num_programs(1) - 1)
    def _finalize():
        o_ref[...] = (acc_ref[...] + b2_ref[...]).astype(o_ref.dtype)


def conformer_feed_forward(x, w1, b1, wv, bv, w2, b2, *,
                           tm=512, compute_dtype=None):
    """x: (B, T, D).  Weights are (in, out); biases are (1, out) or (out,).

    compute_dtype: dtype for MXU inputs (e.g. jnp.bfloat16).  Accumulation is
    always f32; with bf16 compute the gating multiplies are also bf16 and the
    sigmoid reciprocal is approximate (EUP).  Defaults to x.dtype.
    """
    B, T, D = x.shape
    d_ff = w1.shape[1]
    out_dtype = x.dtype
    cdt = jnp.dtype(compute_dtype) if compute_dtype is not None else jnp.dtype(x.dtype)

    elementwise_in_compute = (cdt == jnp.dtype(jnp.bfloat16))
    approx_sigmoid = elementwise_in_compute
    ew_dtype = cdt if elementwise_in_compute else jnp.float32
    # TODO(synk): on v5e (no bf16 VPU/EUP) the bf16 gating math is widened by
    # the compiler; a chip-version check could keep it f32 there.

    M = B * T
    isz = cdt.itemsize
    osz = jnp.dtype(out_dtype).itemsize
    sub = {4: 8, 2: 16, 1: 32}.get(isz, 8)        # sublane pack of compute dtype

    Dp = _round_up(D, 128)                        # lane-dense model dim
    Fp = _round_up(d_ff, 128)                     # lane-dense hidden dim

    # --- row tile -----------------------------------------------------------
    tm = max(sub, min(int(tm), _round_up(M, sub)))
    tm = _round_up(tm, sub)
    # Prefer >= 2 row tiles when there are enough rows (v7x: 2 TCs).
    if M >= 2 * sub and _cdiv(M, tm) < 2:
        tm = _round_up(_cdiv(M, 2), sub)

    # --- generation-aware VMEM budget ---------------------------------------
    try:
        vmem_cap = int(getattr(pltpu.get_tpu_info(), "vmem_capacity_bytes"))
    except Exception:
        vmem_cap = 64 * 1024 * 1024               # conservative (v7x per-TC)
    vmem_budget = vmem_cap * 3 // 4               # headroom for compiler scratch

    def _inter_bytes(tm_, t):
        # In-kernel intermediates: h (tm,2t) f32, gated, cast copy for dot 2.
        b = tm_ * 2 * t * 4
        b += tm_ * t * (isz if elementwise_in_compute else 4)
        b += tm_ * t * isz
        return b

    def _est_resident(tm_):
        return (2 * tm_ * Dp * (isz + osz)                      # x / out tiles (x2 buf)
                + 2 * (Dp * 2 * Fp + Fp * Dp) * isz             # weights (counted x2, safe)
                + 2 * (2 * Fp + Dp) * 4                         # biases
                + _inter_bytes(tm_, Fp))

    def _est_tiled(tm_, t):
        return (2 * (tm_ * Dp * isz + Dp * 2 * t * isz + 2 * t * 4
                     + t * Dp * isz + Dp * 4 + tm_ * Dp * osz)  # double-buffered tiles
                + tm_ * Dp * 4                                  # f32 accumulator
                + _inter_bytes(tm_, t))

    # --- pick configuration: resident fast path if it fits, else tile d_ff ---
    use_resident = False
    tff, n_ff = Fp, 1
    while True:
        if _est_resident(tm) <= vmem_budget:
            use_resident, tff, n_ff = True, Fp, 1
            break
        picked = None
        for t in (t for t in range(Fp, 0, -128) if Fp % t == 0):
            if _est_tiled(tm, t) <= vmem_budget:
                picked = t
                break
        if picked is not None:
            tff, n_ff = picked, Fp // picked
            break
        if tm <= sub:                             # last resort: smallest tiles
            tff = 128 if Fp >= 128 else Fp
            n_ff = Fp // tff
            break
        tm = _round_up(max(sub, tm // 2), sub)

    Mp = _round_up(M, tm)
    est = _est_resident(tm) if use_resident else _est_tiled(tm, tff)
    vmem_limit = int(min(vmem_budget, max(est + (4 << 20), 32 << 20)))

    # --- wrapper-side layout plumbing (one-time, outside the kernel) ---------
    x2 = jnp.pad(x.reshape(M, D), ((0, Mp - M), (0, Dp - D)))
    w1p = jnp.pad(w1, ((0, Dp - D), (0, Fp - d_ff)))
    wvp = jnp.pad(wv, ((0, Dp - D), (0, Fp - d_ff)))
    w2p = jnp.pad(w2, ((0, Fp - d_ff), (0, Dp - D)))
    b1p = jnp.pad(jnp.reshape(b1, (1, -1)), ((0, 0), (0, Fp - d_ff)))
    bvp = jnp.pad(jnp.reshape(bv, (1, -1)), ((0, 0), (0, Fp - d_ff)))
    b2p = jnp.pad(jnp.reshape(b2, (1, -1)), ((0, 0), (0, Dp - D)))

    # Tile-interleave W1/Wv so d_ff tile j is a contiguous (Dp, 2*tff) block
    # [W1_j | Wv_j]; with n_ff == 1 this is plain concatenation.
    w_gv = jnp.stack([w1p.reshape(Dp, n_ff, tff),
                      wvp.reshape(Dp, n_ff, tff)], axis=2).reshape(Dp, 2 * Fp)
    b_gv = jnp.stack([b1p.reshape(n_ff, tff),
                      bvp.reshape(n_ff, tff)], axis=1).reshape(1, 2 * Fp)

    x2 = x2.astype(cdt)
    w_gv = w_gv.astype(cdt)
    w2p = w2p.astype(cdt)
    b_gv = b_gv.astype(jnp.float32)
    b2p = b2p.astype(jnp.float32)

    if use_resident:
        kernel = functools.partial(_ffn_kernel_resident,
                                   approx_sigmoid=approx_sigmoid,
                                   ew_dtype=ew_dtype)
        grid_spec = pltpu.PrefetchScalarGridSpec(
            num_scalar_prefetch=0,
            grid=(Mp // tm,),
            in_specs=[
                pl.BlockSpec((tm, Dp), lambda i: (i, 0)),          # x rows
                pl.BlockSpec((Dp, 2 * Fp), lambda i: (0, 0)),      # [W1|Wv] (resident)
                pl.BlockSpec((1, 2 * Fp), lambda i: (0, 0)),       # [b1|bv]
                pl.BlockSpec((Fp, Dp), lambda i: (0, 0)),          # W2 (resident)
                pl.BlockSpec((1, Dp), lambda i: (0, 0)),           # b2
            ],
            out_specs=pl.BlockSpec((tm, Dp), lambda i: (i, 0)),
        )
        dims = ("parallel",)
    else:
        kernel = functools.partial(_ffn_kernel_tiled,
                                   approx_sigmoid=approx_sigmoid,
                                   ew_dtype=ew_dtype)
        grid_spec = pltpu.PrefetchScalarGridSpec(
            num_scalar_prefetch=0,
            grid=(Mp // tm, n_ff),                                 # reduction axis last
            in_specs=[
                pl.BlockSpec((tm, Dp), lambda i, j: (i, 0)),       # x rows
                pl.BlockSpec((Dp, 2 * tff), lambda i, j: (0, j)),  # [W1|Wv] tile j
                pl.BlockSpec((1, 2 * tff), lambda i, j: (0, j)),   # [b1|bv] tile j
                pl.BlockSpec((tff, Dp), lambda i, j: (j, 0)),      # W2 tile j
                pl.BlockSpec((1, Dp), lambda i, j: (0, 0)),        # b2
            ],
            out_specs=pl.BlockSpec((tm, Dp), lambda i, j: (i, 0)),
            scratch_shapes=[pltpu.VMEM((tm, Dp), jnp.float32)],
        )
        dims = ("parallel", "arbitrary")

    out2 = pl.pallas_call(
        kernel,
        out_shape=jax.ShapeDtypeStruct((Mp, Dp), out_dtype),
        grid_spec=grid_spec,
        compiler_params=pltpu.CompilerParams(
            dimension_semantics=dims,
            vmem_limit_bytes=vmem_limit,
        ),
    )(x2, w_gv, b_gv, w2p, b2p)

    return out2[:M, :D].reshape(B, T, D)


def _init_linear(key, in_f, out_f, dtype=jnp.float32):
    # Deterministic init mimicking nn.Linear's U(-1/sqrt(in), 1/sqrt(in)).
    kw, kb = jax.random.split(key)
    bound = 1.0 / math.sqrt(in_f)
    # Stored pre-transposed: (in_features, out_features).
    w = jax.random.uniform(kw, (in_f, out_f), dtype, -bound, bound)
    b = jax.random.uniform(kb, (1, out_f), dtype, -bound, bound)
    return w, b


if __name__ == "__main__":
    B, T, d_model, d_ff = 2, 8, 32, 64

    key = jax.random.PRNGKey(0)
    kx, k1, kv, k2 = jax.random.split(key, 4)

    x = jax.random.normal(kx, (B, T, d_model), jnp.float32)
    w1, b1 = _init_linear(k1, d_model, d_ff)
    wv, bv = _init_linear(kv, d_model, d_ff)
    w2, b2 = _init_linear(k2, d_ff, d_model)

    # Pure-JAX reference (dropout p=0 is the identity).
    h1 = x @ w1 + b1
    ref = (h1 * jax.nn.sigmoid(h1) * (x @ wv + bv)) @ w2 + b2

    # f32 path: strict check.
    out = conformer_feed_forward(x, w1, b1, wv, bv, w2, b2)
    out = jax.block_until_ready(out)
    assert out.shape == (B, T, d_model)
    assert jnp.allclose(out, ref, atol=1e-5, rtol=1e-5), \
        float(jnp.max(jnp.abs(out - ref)))

    # bf16-MXU path (recommended production config): loose check.
    out_bf16 = conformer_feed_forward(x, w1, b1, wv, bv, w2, b2,
                                      compute_dtype=jnp.bfloat16)
    out_bf16 = jax.block_until_ready(out_bf16)
    assert out_bf16.shape == (B, T, d_model)
    assert jnp.allclose(out_bf16, ref, atol=5e-2, rtol=5e-2), \
        float(jnp.max(jnp.abs(out_bf16 - ref)))

    print("KERNEL_OK")
</pallas_src>

<mosaic_0001>
module attributes {stable_mosaic.version = 11 : i64} {
  func.func @_ffn_kernel_resident(%arg0: i32, %arg1: memref<8x128xf32, #tpu.memory_space<vmem>>, %arg2: memref<128x256xf32, #tpu.memory_space<vmem>>, %arg3: memref<1x256xf32, #tpu.memory_space<vmem>>, %arg4: memref<128x128xf32, #tpu.memory_space<vmem>>, %arg5: memref<1x128xf32, #tpu.memory_space<vmem>>, %arg6: memref<8x128xf32, #tpu.memory_space<vmem>>) attributes {dimension_semantics = [#tpu.dimension_semantics<parallel>], iteration_bounds = array<i64: 2>, scalar_prefetch = 0 : i64, scratch_operands = 0 : i64, tpu.core_type = #tpu.core_type<tc>, window_params = [{transform_indices = @transform_0, window_bounds = array<i64: 8, 128>}, {pipeline_mode = #tpu.pipeline_mode<synchronous>, transform_indices = @transform_1, window_bounds = array<i64: 128, 256>}, {pipeline_mode = #tpu.pipeline_mode<synchronous>, transform_indices = @transform_2, window_bounds = array<i64: 1, 256>}, {pipeline_mode = #tpu.pipeline_mode<synchronous>, transform_indices = @transform_3, window_bounds = array<i64: 128, 128>}, {pipeline_mode = #tpu.pipeline_mode<synchronous>, transform_indices = @transform_4, window_bounds = array<i64: 1, 128>}, {transform_indices = @transform_5, window_bounds = array<i64: 8, 128>}]} {
    %c0 = arith.constant 0 : index
    %c0_0 = arith.constant 0 : index
    %0 = vector.load %arg1[%c0, %c0_0] : memref<8x128xf32, #tpu.memory_space<vmem>>, vector<8x128xf32>
    %c0_1 = arith.constant 0 : index
    %c0_2 = arith.constant 0 : index
    %1 = vector.load %arg2[%c0_1, %c0_2] : memref<128x256xf32, #tpu.memory_space<vmem>>, vector<128x256xf32>
    %cst = arith.constant dense<0.000000e+00> : vector<8x256xf32>
    %2 = tpu.matmul %0, %1, %cst {dimension_numbers = #tpu.dot_dimension_numbers<[1], [0], [0], [1], [0, 0, 1, 1], [], []>} : vector<8x128xf32>, vector<128x256xf32>, vector<8x256xf32> -> vector<8x256xf32>
    %c0_3 = arith.constant 0 : index
    %c0_4 = arith.constant 0 : index
    %3 = vector.load %arg3[%c0_3, %c0_4] : memref<1x256xf32, #tpu.memory_space<vmem>>, vector<1x256xf32>
    %4 = vector.broadcast %3 : vector<1x256xf32> to vector<8x256xf32>
    %5 = arith.addf %2, %4 : vector<8x256xf32>
    %6 = vector.extract_strided_slice %5 {offsets = [0, 0], sizes = [8, 128], strides = [1, 1]} : vector<8x256xf32> to vector<8x128xf32>
    %7 = vector.extract_strided_slice %5 {offsets = [0, 128], sizes = [8, 128], strides = [1, 1]} : vector<8x256xf32> to vector<8x128xf32>
    %8 = arith.negf %6 : vector<8x128xf32>
    %9 = math.exp %8 : vector<8x128xf32>
    %cst_5 = arith.constant 1.000000e+00 : f32
    %10 = vector.broadcast %cst_5 : f32 to vector<8x128xf32>
    %11 = arith.addf %10, %9 : vector<8x128xf32>
    %12 = arith.divf %10, %11 : vector<8x128xf32>
    %13 = arith.mulf %6, %12 : vector<8x128xf32>
    %14 = arith.mulf %13, %7 : vector<8x128xf32>
    %c0_6 = arith.constant 0 : index
    %c0_7 = arith.constant 0 : index
    %15 = vector.load %arg4[%c0_6, %c0_7] : memref<128x128xf32, #tpu.memory_space<vmem>>, vector<128x128xf32>
    %cst_8 = arith.constant dense<0.000000e+00> : vector<8x128xf32>
    %16 = tpu.matmul %14, %15, %cst_8 {dimension_numbers = #tpu.dot_dimension_numbers<[1], [0], [0], [1], [0, 0, 1, 1], [], []>} : vector<8x128xf32>, vector<128x128xf32>, vector<8x128xf32> -> vector<8x128xf32>
    %c0_9 = arith.constant 0 : index
    %c0_10 = arith.constant 0 : index
    %17 = vector.load %arg5[%c0_9, %c0_10] : memref<1x128xf32, #tpu.memory_space<vmem>>, vector<1x128xf32>
    %18 = vector.broadcast %17 : vector<1x128xf32> to vector<8x128xf32>
    %19 = arith.addf %16, %18 : vector<8x128xf32>
    %c0_11 = arith.constant 0 : index
    %c0_12 = arith.constant 0 : index
    %20 = vector.load %arg6[%c0_11, %c0_12] : memref<8x128xf32, #tpu.memory_space<vmem>>, vector<8x128xf32>
    tpu.vector_store %arg6[%c0_11, %c0_12], %19 {strides = array<i32>} : memref<8x128xf32, #tpu.memory_space<vmem>>, vector<8x128xf32>,
    return
  }
  func.func @transform_0(%arg0: i32) -> (i32, i32) {
    %c0_i32 = arith.constant 0 : i32
    %c0_i32_0 = arith.constant 0 : i32
    return %arg0, %c0_i32 : i32, i32
  }
  func.func @transform_1(%arg0: i32) -> (i32, i32) {
    %c0_i32 = arith.constant 0 : i32
    %c0_i32_0 = arith.constant 0 : i32
    %c0_i32_1 = arith.constant 0 : i32
    return %c0_i32, %c0_i32_0 : i32, i32
  }
  func.func @transform_2(%arg0: i32) -> (i32, i32) {
    %c0_i32 = arith.constant 0 : i32
    %c0_i32_0 = arith.constant 0 : i32
    %c0_i32_1 = arith.constant 0 : i32
    return %c0_i32, %c0_i32_0 : i32, i32
  }
  func.func @transform_3(%arg0: i32) -> (i32, i32) {
    %c0_i32 = arith.constant 0 : i32
    %c0_i32_0 = arith.constant 0 : i32
    %c0_i32_1 = arith.constant 0 : i32
    return %c0_i32, %c0_i32_0 : i32, i32
  }
  func.func @transform_4(%arg0: i32) -> (i32, i32) {
    %c0_i32 = arith.constant 0 : i32
    %c0_i32_0 = arith.constant 0 : i32
    %c0_i32_1 = arith.constant 0 : i32
    return %c0_i32, %c0_i32_0 : i32, i32
  }
  func.func @transform_5(%arg0: i32) -> (i32, i32) {
    %c0_i32 = arith.constant 0 : i32
    %c0_i32_0 = arith.constant 0 : i32
    return %arg0, %c0_i32 : i32, i32
  }
}

</mosaic_0001>

<llo_original>
// kernel: tpu_custom_call.1
$region0: #{tpu_custom_call.1}
  #allocation0 [shape = 'u32[]', space=smem, size = 0x4, offset = 0x4, fixed_abs, tag = 'smem constant byte address 0x4 - core index']
  #allocation1 [shape = 'u32[144,128]{1,0:T(1,128)}', space=vmem, size = 0x12000, scoped, tag = 'internal scratch']
  %s0 = inlined_call_operand.hbm [shape: f32[16,128], index: 0, kind: input, shape index: {}]
  %s1 = inlined_call_operand.hbm [shape: f32[128,256], index: 1, kind: input, shape index: {}]
  %s2 = inlined_call_operand.vmem [shape: f32[1,256], index: 2, kind: input, shape index: {}]
  %s3 = inlined_call_operand.hbm [shape: f32[128,128], index: 3, kind: input, shape index: {}]
  %s4 = inlined_call_operand.vmem [shape: f32[1,128], index: 4, kind: input, shape index: {}]
  %s5 = inlined_call_operand.hbm [shape: f32[16,128], index: 5, kind: output, shape index: {}]
  %s6 = sld [smem:[#allocation0]]
  $region65: #{tpu_custom_call.1} parent=0
    _
  %s8 = ssub.s32 1, %s6
  %s9 = scalar_select 0, %s8, %s6
  $region1: #{tpu_custom_call.1} parent=0
    #allocation2 [shape = 'u8[8192]{0}', space=vmem, size = 0x2000, scoped, tag = 'input window, operand 0']
    #allocation3 [shape = 's32[2]{0}', space=sflag, size = 0x8, scoped, tag = 'scoped memory for tpu_custom_call.1']
    #allocation4 [shape = 's32[2]{0}', space=sflag, size = 0x8, scoped, tag = 'scoped memory for tpu_custom_call.1']
    #allocation5 [shape = 'u8[131072]{0}', space=vmem, size = 0x20000, scoped, tag = 'input window, operand 1, single buffered']
    #allocation6 [shape = 's32[1]{0}', space=sflag, size = 0x4, scoped, tag = 'scoped memory for tpu_custom_call.1']
    #allocation7 [shape = 'u8[65536]{0}', space=vmem, size = 0x10000, scoped, tag = 'input window, operand 3, single buffered']
    #allocation8 [shape = 'u8[8192]{0}', space=vmem, size = 0x2000, scoped, tag = 'output window, operand 0']
    %10 = vsyncpa [#allocation3], 0
    %s11 = scalar_lea.sflag [#allocation3], 1
    %12 = vsyncpa %s11, 0
    %13 = vsyncpa [#allocation6], 0
    %14 = vsyncpa [#allocation4], 0
    %s15 = scalar_lea.sflag [#allocation4], 1
    %16 = vsyncpa %s15, 0
    loop: start=0, step=1, limit=4
    $region2: #{tpu_custom_call.1} parent=1 // loop_pre_header
      _
    $region3: #{tpu_custom_call.1} parent=1 // loop_header
      %s18 = sphi 0, %s22
      %p19 = scmp.ge.s32.totalorder %s18, 4
      %s28 = sphi 0, %s30
      %s31 = sphi 0, %s28
      %s32 = sphi 0, %s31
      %s48 = sphi 0, %s32
      %s52 = sphi 0, %s52
      %s54 = sphi 0, %s52
      %s55 = sphi 0, %s54
      %s69 = sphi 0, %s55
      %s73 = sphi 0, %s73
      %s75 = sphi 0, %s73
      %s76 = sphi 0, %s75
      %s90 = sphi 0, %s76
      %s94 = sphi 0, %s94
      %s96 = sphi 0, %s94
      %s97 = sphi 0, %s96
      %s111 = sphi 0, %s97
      %s115 = sphi 0, %s115
      %s117 = sphi 0, %s115
      %s118 = sphi 0, %s117
      %s132 = sphi 0, %s118
      %s138 = sphi 0, %s140
      %s141 = sphi 0, %s138
      %s142 = sphi 0, %s141
      %s158 = sphi 0, %s142
    $region4: #{tpu_custom_call.1} parent=1 // loop_header_branch
      %21 = sbr.rel (%p19) target = $region8
    $region5: #{tpu_custom_call.1} parent=1 // loop_body
      %s23 = ssub.s32 %s18, 1
      %s24 = ssub.s32 %s18, 2
      %s25 = sadd.s32 %s18, 1
      %s26 = ssub.s32 %s18, %s25
      %p27 = scmp.eq.s32.totalorder %s26, 0
      %s29 = sadd.s32 %s28, 1
      %s30 = scalar_select %p27, %s28, %s29
      %p33 = pneg %p27
      %p34 = scmp.eq.s32.totalorder %s18, 1
      %p35 = por %p33, %p34
      %p36 = scmp.ne.s32.totalorder %s28, %s31
      %p37 = scmp.eq.s32.totalorder %s18, 0
      %p38 = por %p36, %p37
      %p39 = scmp.ne.s32.totalorder %s28, %s31
      %p40 = scmp.eq.s32.totalorder %s23, 1
      %p41 = por %p39, %p40
      %p42 = scmp.ne.s32.totalorder %s31, %s32
      %p43 = scmp.eq.s32.totalorder %s23, 0
      %p44 = por %p42, %p43
      %p45 = scmp.ne.s32.totalorder %s31, %s32
      %p46 = scmp.eq.s32.totalorder %s24, 1
      %p47 = por %p45, %p46
      %p49 = scmp.ne.s32.totalorder %s32, %s48
      %p50 = scmp.eq.s32.totalorder %s24, 0
      %p51 = por %p49, %p50
      %s53 = sadd.s32 %s52, 1
      %p56 = scmp.eq.s32.totalorder %s18, 1
      %p57 = scmp.ne.s32.totalorder %s52, %s54
      %p58 = scmp.eq.s32.totalorder %s18, 0
      %p59 = por %p57, %p58
      %p60 = scmp.ne.s32.totalorder %s52, %s54
      %p61 = scmp.eq.s32.totalorder %s23, 1
      %p62 = por %p60, %p61
      %p63 = scmp.ne.s32.totalorder %s54, %s55
      %p64 = scmp.eq.s32.totalorder %s23, 0
      %p65 = por %p63, %p64
      %p66 = scmp.ne.s32.totalorder %s54, %s55
      %p67 = scmp.eq.s32.totalorder %s24, 1
      %p68 = por %p66, %p67
      %p70 = scmp.ne.s32.totalorder %s55, %s69
      %p71 = scmp.eq.s32.totalorder %s24, 0
      %p72 = por %p70, %p71
      %s74 = sadd.s32 %s73, 1
      %p77 = scmp.eq.s32.totalorder %s18, 1
      %p78 = scmp.ne.s32.totalorder %s73, %s75
      %p79 = scmp.eq.s32.totalorder %s18, 0
      %p80 = por %p78, %p79
      %p81 = scmp.ne.s32.totalorder %s73, %s75
      %p82 = scmp.eq.s32.totalorder %s23, 1
      %p83 = por %p81, %p82
      %p84 = scmp.ne.s32.totalorder %s75, %s76
      %p85 = scmp.eq.s32.totalorder %s23, 0
      %p86 = por %p84, %p85
      %p87 = scmp.ne.s32.totalorder %s75, %s76
      %p88 = scmp.eq.s32.totalorder %s24, 1
      %p89 = por %p87, %p88
      %p91 = scmp.ne.s32.totalorder %s76, %s90
      %p92 = scmp.eq.s32.totalorder %s24, 0
      %p93 = por %p91, %p92
      %s95 = sadd.s32 %s94, 1
      %p98 = scmp.eq.s32.totalorder %s18, 1
      %p99 = scmp.ne.s32.totalorder %s94, %s96
      %p100 = scmp.eq.s32.totalorder %s18, 0
      %p101 = por %p99, %p100
      %p102 = scmp.ne.s32.totalorder %s94, %s96
      %p103 = scmp.eq.s32.totalorder %s23, 1
      %p104 = por %p102, %p103
      %p105 = scmp.ne.s32.totalorder %s96, %s97
      %p106 = scmp.eq.s32.totalorder %s23, 0
      %p107 = por %p105, %p106
      %p108 = scmp.ne.s32.totalorder %s96, %s97
      %p109 = scmp.eq.s32.totalorder %s24, 1
      %p110 = por %p108, %p109
      %p112 = scmp.ne.s32.totalorder %s97, %s111
      %p113 = scmp.eq.s32.totalorder %s24, 0
      %p114 = por %p112, %p113
      %s116 = sadd.s32 %s115, 1
      %p119 = scmp.eq.s32.totalorder %s18, 1
      %p120 = scmp.ne.s32.totalorder %s115, %s117
      %p121 = scmp.eq.s32.totalorder %s18, 0
      %p122 = por %p120, %p121
      %p123 = scmp.ne.s32.totalorder %s115, %s117
      %p124 = scmp.eq.s32.totalorder %s23, 1
      %p125 = por %p123, %p124
      %p126 = scmp.ne.s32.totalorder %s117, %s118
      %p127 = scmp.eq.s32.totalorder %s23, 0
      %p128 = por %p126, %p127
      %p129 = scmp.ne.s32.totalorder %s117, %s118
      %p130 = scmp.eq.s32.totalorder %s24, 1
      %p131 = por %p129, %p130
      %p133 = scmp.ne.s32.totalorder %s118, %s132
      %p134 = scmp.eq.s32.totalorder %s24, 0
      %p135 = por %p133, %p134
      %s136 = ssub.s32 %s18, %s25
      %p137 = scmp.eq.s32.totalorder %s136, 0
      %s139 = sadd.s32 %s138, 1
      %s140 = scalar_select %p137, %s138, %s139
      %p143 = pneg %p137
      %p144 = scmp.eq.s32.totalorder %s18, 1
      %p145 = por %p143, %p144
      %p146 = scmp.ne.s32.totalorder %s138, %s141
      %p147 = scmp.eq.s32.totalorder %s18, 0
      %p148 = por %p146, %p147
      %p149 = scmp.ne.s32.totalorder %s138, %s141
      %p150 = scmp.eq.s32.totalorder %s23, 1
      %p151 = por %p149, %p150
      %p152 = scmp.ne.s32.totalorder %s141, %s142
      %p153 = scmp.eq.s32.totalorder %s23, 0
      %p154 = por %p152, %p153
      %p155 = scmp.ne.s32.totalorder %s141, %s142
      %p156 = scmp.eq.s32.totalorder %s24, 1
      %p157 = por %p155, %p156
      %p159 = scmp.ne.s32.totalorder %s142, %s158
      %p160 = scmp.eq.s32.totalorder %s24, 0
      %p161 = por %p159, %p160
      %p162 = scmp.le.s32.totalorder 1, %s18
      %p163 = scmp.lt.s32.totalorder %s18, 3
      %p164 = pnand %p162, %p163
      %p165 = pneg %p164
      // Predicated region
      $region9: #{tpu_custom_call.1} parent=5 // pred_check
        _
      $region10: #{tpu_custom_call.1} parent=5 // pred_check_branch
        %167 = sbr.rel (%p164) target = $region12
      $region11: #{tpu_custom_call.1} parent=5 // pred_region
        %s168 = ssub.s32 %s18, 1
        // Predicated region
        $region13: #{tpu_custom_call.1} parent=11 // pred_check
          %p169 = pneg %p65
        $region14: #{tpu_custom_call.1} parent=11 // pred_check_branch
          %171 = sbr.rel (%p169) target = $region16
        $region15: #{tpu_custom_call.1} parent=11 // pred_region
          %s173 = ssub.s32 4096, 4096
          %174 = vsyncadd [#allocation6], %s173
          %s175 = sshll.u32 [#allocation5], 4
          %s176 = int_to_ptr.vmem [resolvable:$true] %s175
          %181 = dma.hbm_to_vmem [thread:$0]  %s1, 4096, %s176, [#allocation6], 256, 256, 16
        $region16: #{tpu_custom_call.1} parent=11 // pred_fallthru
          _
        // Predicated region
        $region17: #{tpu_custom_call.1} parent=11 // pred_check
          %p182 = pneg %p86
        $region18: #{tpu_custom_call.1} parent=11 // pred_check_branch
          %184 = sbr.rel (%p182) target = $region20
        $region19: #{tpu_custom_call.1} parent=11 // pred_region
          _
        $region20: #{tpu_custom_call.1} parent=11 // pred_fallthru
          _
        // Predicated region
        $region21: #{tpu_custom_call.1} parent=11 // pred_check
          %p185 = pneg %p107
        $region22: #{tpu_custom_call.1} parent=11 // pred_check_branch
          %187 = sbr.rel (%p185) target = $region24
        $region23: #{tpu_custom_call.1} parent=11 // pred_region
          %s189 = ssub.s32 2048, 2048
          %190 = vsyncadd [#allocation6], %s189
          %s191 = sshll.u32 [#allocation7], 4
          %s192 = int_to_ptr.vmem [resolvable:$true] %s191
          %197 = dma.hbm_to_vmem [thread:$0]  %s3, 2048, %s192, [#allocation6], 128, 128, 8
        $region24: #{tpu_custom_call.1} parent=11 // pred_fallthru
          _
        // Predicated region
        $region25: #{tpu_custom_call.1} parent=11 // pred_check
          %p198 = pneg %p128
        $region26: #{tpu_custom_call.1} parent=11 // pred_check_branch
          %200 = sbr.rel (%p198) target = $region28
        $region27: #{tpu_custom_call.1} parent=11 // pred_region
          _
        $region28: #{tpu_custom_call.1} parent=11 // pred_fallthru
          _
      $region12: #{tpu_custom_call.1} parent=5 // pred_fallthru
        _
      %p201 = scmp.lt.s32.totalorder %s18, 2
      // Predicated region
      $region29: #{tpu_custom_call.1} parent=5 // pred_check
        %p202 = pneg %p201
      $region30: #{tpu_custom_call.1} parent=5 // pred_check_branch
        %204 = sbr.rel (%p202) target = $region32
      $region31: #{tpu_custom_call.1} parent=5 // pred_region
        // Predicated region
        $region33: #{tpu_custom_call.1} parent=31 // pred_check
          %p205 = pneg %p38
        $region34: #{tpu_custom_call.1} parent=31 // pred_check_branch
          %207 = sbr.rel (%p205) target = $region36
        $region35: #{tpu_custom_call.1} parent=31 // pred_region
          %s208 = sand.u32 %s28, 1
          %s209 = scalar_lea.sflag [#allocation3], %s208
          %s210 = sand.u32 %s28, 1
          %s211 = smul.addr %s210, 8
          %s212 = scalar_lea.vmem [#allocation2], %s211
          %s214 = ssub.s32 128, 128
          %215 = vsyncadd %s209, %s214
          %s216 = smul.addr %s18, 128
          %s217 = scalar_lea.hbm %s0, %s216
          %s219 = sshll.u32 %s212, 4
          %s220 = int_to_ptr.vmem [resolvable:$true] %s219
          %222 = dma.hbm_to_vmem [thread:$0]  %s217, 128, %s220, %s209
        $region36: #{tpu_custom_call.1} parent=31 // pred_fallthru
          _
      $region32: #{tpu_custom_call.1} parent=5 // pred_fallthru
        _
      %p223 = scmp.le.s32.totalorder 1, %s18
      %p224 = scmp.lt.s32.totalorder %s18, 3
      %p225 = pnand %p223, %p224
      %p226 = pneg %p225
      // Predicated region
      $region37: #{tpu_custom_call.1} parent=5 // pred_check
        _
      $region38: #{tpu_custom_call.1} parent=5 // pred_check_branch
        %228 = sbr.rel (%p225) target = $region40
      $region39: #{tpu_custom_call.1} parent=5 // pred_region
        %s229 = ssub.s32 %s18, 1
        %s230 = sand.u32 %s31, 1
        %s231 = scalar_lea.sflag [#allocation3], %s230
        %s232 = sand.u32 %s31, 1
        %s233 = smul.addr %s232, 8
        %s234 = scalar_lea.vmem [#allocation2], %s233
        // Predicated region
        $region41: #{tpu_custom_call.1} parent=39 // pred_check
          %p235 = pneg %p44
        $region42: #{tpu_custom_call.1} parent=39 // pred_check_branch
          %237 = sbr.rel (%p235) target = $region44
        $region43: #{tpu_custom_call.1} parent=39 // pred_region
          %238 = dma.done %s231, 128
        $region44: #{tpu_custom_call.1} parent=39 // pred_fallthru
          _
        // Predicated region
        $region45: #{tpu_custom_call.1} parent=39 // pred_check
          %p239 = pneg %p65
        $region46: #{tpu_custom_call.1} parent=39 // pred_check_branch
          %241 = sbr.rel (%p239) target = $region48
        $region47: #{tpu_custom_call.1} parent=39 // pred_region
          %242 = dma.done [#allocation6], 4096
        $region48: #{tpu_custom_call.1} parent=39 // pred_fallthru
          _
        // Predicated region
        $region49: #{tpu_custom_call.1} parent=39 // pred_check
          %p243 = pneg %p107
        $region50: #{tpu_custom_call.1} parent=39 // pred_check_branch
          %245 = sbr.rel (%p243) target = $region52
        $region51: #{tpu_custom_call.1} parent=39 // pred_region
          %246 = dma.done [#allocation6], 2048
        $region52: #{tpu_custom_call.1} parent=39 // pred_fallthru
          _
        %s247 = sand.u32 %s31, 1
        %s248 = scalar_lea.sflag [#allocation3], %s247
        %s249 = sand.u32 %s31, 1
        %s250 = smul.addr %s249, 8
        %s251 = scalar_lea.vmem [#allocation2], %s250
        %p252 = pneg %p44
        %p253 = pneg %p41
        %p254 = pneg %p65
        %p255 = pneg %p62
        %p256 = pneg %p86
        %p257 = pneg %p83
        %p258 = pneg %p107
        %p259 = pneg %p104
        %p260 = pneg %p128
        %p261 = pneg %p125
        %p262 = pneg %p154
        %p263 = pneg %p151
        %s264 = sand.u32 %s141, 1
        %s265 = scalar_lea.sflag [#allocation4], %s264
        %s266 = sand.u32 %s141, 1
        %s267 = smul.addr %s266, 8
        %s268 = scalar_lea.vmem [#allocation8], %s267
        %v269 = vld [vmem:[%s234] sm:$0xff]
        %v270 = vld [vmem:[#allocation5] sm:$0xff]
        %v271 = vld [vmem:[#allocation5 + $0x8] sm:$0xff]
        %v272 = vld [vmem:[#allocation5 + $0x10] sm:$0xff]
        %v273 = vld [vmem:[#allocation5 + $0x18] sm:$0xff]
        %v274 = vld [vmem:[#allocation5 + $0x20] sm:$0xff]
        %v275 = vld [vmem:[#allocation5 + $0x28] sm:$0xff]
        %v276 = vld [vmem:[#allocation5 + $0x30] sm:$0xff]
        %v277 = vld [vmem:[#allocation5 + $0x38] sm:$0xff]
        %v278 = vld [vmem:[#allocation5 + $0x40] sm:$0xff]
        %v279 = vld [vmem:[#allocation5 + $0x48] sm:$0xff]
        %v280 = vld [vmem:[#allocation5 + $0x50] sm:$0xff]
        %v281 = vld [vmem:[#allocation5 + $0x58] sm:$0xff]
        %v282 = vld [vmem:[#allocation5 + $0x60] sm:$0xff]
        %v283 = vld [vmem:[#allocation5 + $0x68] sm:$0xff]
        %v284 = vld [vmem:[#allocation5 + $0x70] sm:$0xff]
        %v285 = vld [vmem:[#allocation5 + $0x78] sm:$0xff]
        %v286 = vld [vmem:[#allocation5 + $0x80] sm:$0xff]
        %v287 = vld [vmem:[#allocation5 + $0x88] sm:$0xff]
        %v288 = vld [vmem:[#allocation5 + $0x90] sm:$0xff]
        %v289 = vld [vmem:[#allocation5 + $0x98] sm:$0xff]
        %v290 = vld [vmem:[#allocation5 + $0xa0] sm:$0xff]
        %v291 = vld [vmem:[#allocation5 + $0xa8] sm:$0xff]
        %v292 = vld [vmem:[#allocation5 + $0xb0] sm:$0xff]
        %v293 = vld [vmem:[#allocation5 + $0xb8] sm:$0xff]
        %v294 = vld [vmem:[#allocation5 + $0xc0] sm:$0xff]
        %v295 = vld [vmem:[#allocation5 + $0xc8] sm:$0xff]
        %v296 = vld [vmem:[#allocation5 + $0xd0] sm:$0xff]
        %v297 = vld [vmem:[#allocation5 + $0xd8] sm:$0xff]
        %v298 = vld [vmem:[#allocation5 + $0xe0] sm:$0xff]
        %v299 = vld [vmem:[#allocation5 + $0xe8] sm:$0xff]
        %v300 = vld [vmem:[#allocation5 + $0xf0] sm:$0xff]
        %v301 = vld [vmem:[#allocation5 + $0xf8] sm:$0xff]
        %v302 = vld [vmem:[%s2] sm:$0x3]
        %v304 = vlaneseq
        %v305 = vshrl.u32 %v304, 7
        %v306 = vsub.s32 0, %v305
        %v307 = vrot.slane %v302, %v306
        %v308 = vlaneseq
        %v309 = vshrl.u32 %v308, 7
        %v310 = vsub.s32 1, %v309
        %v311 = vrot.slane %v302, %v310
        %314 = vmatprep.subr.mxu0 %v301
        %315 = vmatpush1.msra.mxu0 %v300
        %316 = vmatprep.subr.mxu0 %v299
        %317 = vmatpush1.msra.mxu0 %v298
        %318 = vmatprep.subr.mxu0 %v297
        %319 = vmatpush1.msra.mxu0 %v296
        %320 = vmatprep.subr.mxu0 %v295
        %321 = vmatpush1.msra.mxu0 %v294
        %322 = vmatprep.subr.mxu0 %v293
        %323 = vmatpush1.msra.mxu0 %v292
        %324 = vmatprep.subr.mxu0 %v291
        %325 = vmatpush1.msra.mxu0 %v290
        %326 = vmatprep.subr.mxu0 %v289
        %327 = vmatpush1.msra.mxu0 %v288
        %328 = vmatprep.subr.mxu0 %v287
        %329 = vmatpush1.msra.mxu0 %v286
        %330 = vmatprep.subr.mxu0 %v285
        %331 = vmatpush1.msra.mxu0 %v284
        %332 = vmatprep.subr.mxu0 %v283
        %333 = vmatpush1.msra.mxu0 %v282
        %334 = vmatprep.subr.mxu0 %v281
        %335 = vmatpush1.msra.mxu0 %v280
        %336 = vmatprep.subr.mxu0 %v279
        %337 = vmatpush1.msra.mxu0 %v278
        %338 = vmatprep.subr.mxu0 %v277
        %339 = vmatpush1.msra.mxu0 %v276
        %340 = vmatprep.subr.mxu0 %v275
        %341 = vmatpush1.msra.mxu0 %v274
        %342 = vmatprep.subr.mxu0 %v273
        %343 = vmatpush1.msra.mxu0 %v272
        %344 = vmatprep.subr.mxu0 %v271
        %345 = vmatpush1.msra.mxu0 %v270
        %346 = vmatprep.subr.mxu0 0.0
        %347 = vmatpush2.msra.mxu0 0.0
        %348 = vmatprep.subr.mxu0 0.0
        %349 = vmatpush2.msra.mxu0 0.0
        %350 = vmatprep.subr.mxu0 0.0
        %351 = vmatpush2.msra.mxu0 0.0
        %352 = vmatprep.subr.mxu0 0.0
        %353 = vmatpush2.msra.mxu0 0.0
        %354 = vmatprep.subr.mxu0 0.0
        %355 = vmatpush2.msra.mxu0 0.0
        %356 = vmatprep.subr.mxu0 0.0
        %357 = vmatpush2.msra.mxu0 0.0
        %358 = vmatprep.subr.mxu0 0.0
        %359 = vmatpush2.msra.mxu0 0.0
        %360 = vmatprep.subr.mxu0 0.0
        %361 = vmatpush2.msra.mxu0 0.0
        %362 = vmatprep.subr.mxu0 0.0
        %363 = vmatpush2.msra.mxu0 0.0
        %364 = vmatprep.subr.mxu0 0.0
        %365 = vmatpush2.msra.mxu0 0.0
        %366 = vmatprep.subr.mxu0 0.0
        %367 = vmatpush2.msra.mxu0 0.0
        %368 = vmatprep.subr.mxu0 0.0
        %369 = vmatpush2.msra.mxu0 0.0
        %370 = vmatprep.subr.mxu0 0.0
        %371 = vmatpush2.msra.mxu0 0.0
        %372 = vmatprep.subr.mxu0 0.0
        %373 = vmatpush2.msra.mxu0 0.0
        %374 = vmatprep.subr.mxu0 0.0
        %375 = vmatpush2.msra.mxu0 0.0
        %376 = vmatprep.subr.mxu0 0.0
        %377 = vmatpush2.msra.mxu0 0.0
        %378 = vmatprep.mubr.f32.mxu0 0.0
        %379 = vmatmul.mubr.f32.gmra.mxu0 %v269
        %v380 = vpop.f32.mrf.mxu0
        %v381 = vadd.f32 %v307, %v380
        %v382 = vpop.f32.mrf.mxu0
        %v383 = vadd.f32 %v311, %v382
        %384 = vdwg.mxu0
        %v385 = vxor.u32 %v381, 2147483648
        %v386 = vmul.f32 %v385, 1.442695
        %v387 = vpow.pop %v386
        %v388 = vadd.f32 %v387, 1.0
        %v389 = vrcp.pop %v388
        %v390 = vmul.f32 1.0, %v389
        %v391 = vmul.f32 %v381, %v390
        %v392 = vmul.f32 %v391, %v383
        %v393 = vld [vmem:[#allocation7] sm:$0xff]
        %v394 = vld [vmem:[#allocation7 + $0x8] sm:$0xff]
        %v395 = vld [vmem:[#allocation7 + $0x10] sm:$0xff]
        %v396 = vld [vmem:[#allocation7 + $0x18] sm:$0xff]
        %v397 = vld [vmem:[#allocation7 + $0x20] sm:$0xff]
        %v398 = vld [vmem:[#allocation7 + $0x28] sm:$0xff]
        %v399 = vld [vmem:[#allocation7 + $0x30] sm:$0xff]
        %v400 = vld [vmem:[#allocation7 + $0x38] sm:$0xff]
        %v401 = vld [vmem:[#allocation7 + $0x40] sm:$0xff]
        %v402 = vld [vmem:[#allocation7 + $0x48] sm:$0xff]
        %v403 = vld [vmem:[#allocation7 + $0x50] sm:$0xff]
        %v404 = vld [vmem:[#allocation7 + $0x58] sm:$0xff]
        %v405 = vld [vmem:[#allocation7 + $0x60] sm:$0xff]
        %v406 = vld [vmem:[#allocation7 + $0x68] sm:$0xff]
        %v407 = vld [vmem:[#allocation7 + $0x70] sm:$0xff]
        %v408 = vld [vmem:[#allocation7 + $0x78] sm:$0xff]
        %v409 = vld [vmem:[%s4] sm:$0x1]
        %v411 = vlaneseq
        %v412 = vshrl.u32 %v411, 7
        %v413 = vsub.s32 0, %v412
        %v414 = vrot.slane %v409, %v413
        %416 = vmatprep.subr.mxu0 0.0
        %417 = vmatpush1.msra.mxu0 %v408
        %418 = vmatprep.subr.mxu0 0.0
        %419 = vmatpush1.msra.mxu0 %v407
        %420 = vmatprep.subr.mxu0 0.0
        %421 = vmatpush1.msra.mxu0 %v406
        %422 = vmatprep.subr.mxu0 0.0
        %423 = vmatpush1.msra.mxu0 %v405
        %424 = vmatprep.subr.mxu0 0.0
        %425 = vmatpush1.msra.mxu0 %v404
        %426 = vmatprep.subr.mxu0 0.0
        %427 = vmatpush1.msra.mxu0 %v403
        %428 = vmatprep.subr.mxu0 0.0
        %429 = vmatpush1.msra.mxu0 %v402
        %430 = vmatprep.subr.mxu0 0.0
        %431 = vmatpush1.msra.mxu0 %v401
        %432 = vmatprep.subr.mxu0 0.0
        %433 = vmatpush1.msra.mxu0 %v400
        %434 = vmatprep.subr.mxu0 0.0
        %435 = vmatpush1.msra.mxu0 %v399
        %436 = vmatprep.subr.mxu0 0.0
        %437 = vmatpush1.msra.mxu0 %v398
        %438 = vmatprep.subr.mxu0 0.0
        %439 = vmatpush1.msra.mxu0 %v397
        %440 = vmatprep.subr.mxu0 0.0
        %441 = vmatpush1.msra.mxu0 %v396
        %442 = vmatprep.subr.mxu0 0.0
        %443 = vmatpush1.msra.mxu0 %v395
        %444 = vmatprep.subr.mxu0 0.0
        %445 = vmatpush1.msra.mxu0 %v394
        %446 = vmatprep.subr.mxu0 0.0
        %447 = vmatpush1.msra.mxu0 %v393
        %448 = vmatprep.subr.mxu0 0.0
        %449 = vmatpush2.msra.mxu0 0.0
        %450 = vmatprep.subr.mxu0 0.0
        %451 = vmatpush2.msra.mxu0 0.0
        %452 = vmatprep.subr.mxu0 0.0
        %453 = vmatpush2.msra.mxu0 0.0
        %454 = vmatprep.subr.mxu0 0.0
        %455 = vmatpush2.msra.mxu0 0.0
        %456 = vmatprep.subr.mxu0 0.0
        %457 = vmatpush2.msra.mxu0 0.0
        %458 = vmatprep.subr.mxu0 0.0
        %459 = vmatpush2.msra.mxu0 0.0
        %460 = vmatprep.subr.mxu0 0.0
        %461 = vmatpush2.msra.mxu0 0.0
        %462 = vmatprep.subr.mxu0 0.0
        %463 = vmatpush2.msra.mxu0 0.0
        %464 = vmatprep.subr.mxu0 0.0
        %465 = vmatpush2.msra.mxu0 0.0
        %466 = vmatprep.subr.mxu0 0.0
        %467 = vmatpush2.msra.mxu0 0.0
        %468 = vmatprep.subr.mxu0 0.0
        %469 = vmatpush2.msra.mxu0 0.0
        %470 = vmatprep.subr.mxu0 0.0
        %471 = vmatpush2.msra.mxu0 0.0
        %472 = vmatprep.subr.mxu0 0.0
        %473 = vmatpush2.msra.mxu0 0.0
        %474 = vmatprep.subr.mxu0 0.0
        %475 = vmatpush2.msra.mxu0 0.0
        %476 = vmatprep.subr.mxu0 0.0
        %477 = vmatpush2.msra.mxu0 0.0
        %478 = vmatprep.subr.mxu0 0.0
        %479 = vmatpush2.msra.mxu0 0.0
        %480 = vmatprep.mubr.f32.mxu0 0.0
        %481 = vmatmul.mubr.f32.gmra.mxu0 %v392
        %v482 = vpop.f32.mrf.mxu0
        %v483 = vadd.f32 %v414, %v482
        %v484 = vpop.f32.mrf.mxu0
        %485 = vdwg.mxu0
        %486 = vst [vmem:[%s268] sm:$0xff] %v483
        %s487 = sand.u32 %s141, 1
        %s488 = scalar_lea.sflag [#allocation4], %s487
        %s489 = sand.u32 %s141, 1
        %s490 = smul.addr %s489, 8
        %s491 = scalar_lea.vmem [#allocation8], %s490
        // Predicated region
        $region53: #{tpu_custom_call.1} parent=39 // pred_check
          %p492 = pneg %p151
        $region54: #{tpu_custom_call.1} parent=39 // pred_check_branch
          %494 = sbr.rel (%p492) target = $region56
        $region55: #{tpu_custom_call.1} parent=39 // pred_region
          %s496 = ssub.s32 128, 128
          %497 = vsyncadd %s488, %s496
          %s498 = smul.addr %s23, 128
          %s499 = scalar_lea.hbm %s5, %s498
          %s501 = sshll.u32 %s491, 4
          %s502 = int_to_ptr.vmem [resolvable:$true] %s501
          %504 = dma.vmem_to_hbm [thread:$0]  %s502, 128, %s499, %s488
        $region56: #{tpu_custom_call.1} parent=39 // pred_fallthru
          _
      $region40: #{tpu_custom_call.1} parent=5 // pred_fallthru
        _
      %p505 = scmp.le.s32.totalorder 2, %s18
      // Predicated region
      $region57: #{tpu_custom_call.1} parent=5 // pred_check
        %p506 = pneg %p505
      $region58: #{tpu_custom_call.1} parent=5 // pred_check_branch
        %508 = sbr.rel (%p506) target = $region60
      $region59: #{tpu_custom_call.1} parent=5 // pred_region
        %s509 = ssub.s32 %s18, 2
        // Predicated region
        $region61: #{tpu_custom_call.1} parent=59 // pred_check
          %p510 = pneg %p157
        $region62: #{tpu_custom_call.1} parent=59 // pred_check_branch
          %512 = sbr.rel (%p510) target = $region64
        $region63: #{tpu_custom_call.1} parent=59 // pred_region
          %s513 = sand.u32 %s142, 1
          %s514 = scalar_lea.sflag [#allocation4], %s513
          %s515 = sand.u32 %s142, 1
          %s516 = smul.addr %s515, 8
          %s517 = scalar_lea.vmem [#allocation8], %s516
          %518 = dma.done %s514, 128
        $region64: #{tpu_custom_call.1} parent=59 // pred_fallthru
          _
      $region60: #{tpu_custom_call.1} parent=5 // pred_fallthru
        _
    $region6: #{tpu_custom_call.1} parent=1 // loop_footer
      %s22 = sadd.s32 1, %s18
    $region7: #{tpu_custom_call.1} parent=1 // loop_footer_branch
      %17 = sbr.rel target = $region3
    $region8: #{tpu_custom_call.1} parent=1 // loop_exit
      _
    %519 = vsyncpa [#allocation3], 1
    %s520 = scalar_lea.sflag [#allocation3], 1
    %521 = vsyncpa %s520, 1
    %522 = vsyncpa [#allocation6], 1
    %523 = vsyncpa [#allocation4], 1
    %s524 = scalar_lea.sflag [#allocation4], 1
    %525 = vsyncpa %s524, 1

</llo_original>
